<compile_context>
chip_gen: v7x
topology: tpu7x:2x2x1
jax: 0.10.0
libtpu: 0.0.40
codegen_flags: <defaults>
</compile_context>

<pallas_src>
import functools

import jax
import jax.numpy as jnp
from jax.experimental import pallas as pl
from jax.experimental.pallas import tpu as pltpu


# ----------------------------- Pallas kernel ------------------------------ #
def _eca_kernel(w_ref, x_ref, o_ref, *, true_n):
    """w_ref: SMEM (k,) conv taps; x_ref / o_ref: VMEM (Bt, C, Np) blocks."""
    k = w_ref.shape[0]
    pad = (k - 1) // 2
    Bt, C, Np = x_ref.shape

    # 1) AdaptiveAvgPool1d(1): per-(batch, channel) mean over the points.
    #    Lanes beyond true_n were zero-padded in the wrapper, so the sum is
    #    exact; divide by the true point count.
    mean = jnp.sum(x_ref[...], axis=-1) * (1.0 / true_n)        # (Bt, C)

    # 2) Conv1d(1, 1, k, padding=pad, bias=False) along the channel axis,
    #    as k shifted scalar-weighted adds on the (Bt, C) lane layout (VPU).
    if pad > 0:
        z = jnp.zeros((Bt, pad), jnp.float32)
        mp = jnp.concatenate([z, mean, z], axis=-1)             # (Bt, C+2*pad)
    else:
        mp = mean
    y = jnp.zeros((Bt, C), jnp.float32)
    for j in range(k):                                          # k tiny & static
        y = y + w_ref[j] * mp[:, j:j + C]

    # 3) Softmax over channels (lane-axis reduce; C is tiny).
    m = jnp.max(y, axis=-1, keepdims=True)                      # (Bt, 1)
    e = jnp.exp(y - m)
    s = jnp.sum(e, axis=-1, keepdims=True)                      # (Bt, 1)
    attn = e / s                                                # (Bt, C)

    # 4) Rescale: re-read x at the point of use (clean vld -> vmul -> vst).
    o_ref[...] = (x_ref[...] * attn[:, :, None]).astype(o_ref.dtype)


# ------------------------------ host wrapper ------------------------------ #
def eca_pallas(x, conv_w, *, target_block_bytes=4 << 20,
               vmem_limit_bytes=32 << 20):
    """x: (B, C, N) float32, conv_w: (k,) float32 -> (B, C, N) float32."""
    B, C, N = x.shape

    # Lane-dense padding of the point axis to a multiple of 128.
    Np = ((N + 127) // 128) * 128

    # Batch-merge: MiB-scale blocks, but keep >= 2 grid steps when B >= 2 so
    # both v7x TensorCores stream (v5e/v6e have 1 TC; a longer grid is free).
    per_batch_bytes = C * Np * 4
    bt = max(1, target_block_bytes // per_batch_bytes)
    if B >= 2:
        bt = min(bt, (B + 1) // 2)
    bt = int(min(bt, B))
    Bp = ((B + bt - 1) // bt) * bt

    xp = x
    if Np != N or Bp != B:
        xp = jnp.pad(x, ((0, Bp - B), (0, 0), (0, Np - N)))

    out = pl.pallas_call(
        functools.partial(_eca_kernel, true_n=N),
        out_shape=jax.ShapeDtypeStruct((Bp, C, Np), jnp.float32),
        grid=(Bp // bt,),
        in_specs=[
            pl.BlockSpec(memory_space=pltpu.MemorySpace.SMEM),   # conv taps
            pl.BlockSpec((bt, C, Np), lambda b: (b, 0, 0)),      # x slab
        ],
        out_specs=pl.BlockSpec((bt, C, Np), lambda b: (b, 0, 0)),
        compiler_params=pltpu.CompilerParams(
            dimension_semantics=("parallel",),
            vmem_limit_bytes=vmem_limit_bytes),
    )(conv_w, xp)

    if Np != N or Bp != B:
        out = out[:B, :, :N]
    return out


# --------------------------- pure-JAX reference ---------------------------- #
def eca_reference(x, conv_w):
    B, C, N = x.shape
    k = conv_w.shape[0]
    pad = (k - 1) // 2
    y = jnp.mean(x, axis=2)                               # (B, C)
    yp = jnp.pad(y, ((0, 0), (pad, pad)))                 # zero padding
    conv = sum(conv_w[j] * yp[:, j:j + C] for j in range(k))   # (B, C)
    attn = jax.nn.softmax(conv, axis=1)                   # softmax over channels
    return x * attn[:, :, None]


# --------------------------------- main ------------------------------------ #
if __name__ == "__main__":
    # Small shapes; N deliberately NOT a multiple of 128 and B > Bt so the
    # lane-padding and batch-merge paths are exercised.
    B, C, N, K_SIZE = 4, 16, 200, 3

    key = jax.random.PRNGKey(0)
    kx, kw = jax.random.split(key)
    x = jax.random.normal(kx, (B, C, N), jnp.float32)
    conv_w = jax.random.normal(kw, (K_SIZE,), jnp.float32) * 0.5

    out = jax.block_until_ready(eca_pallas(x, conv_w))

    ref = eca_reference(x, conv_w)
    assert out.shape == (B, C, N), out.shape
    assert bool(jnp.all(jnp.isfinite(out)))
    max_err = float(jnp.max(jnp.abs(out - ref)))
    assert max_err < 1e-4, f"mismatch vs reference, max_err={max_err}"
    print("KERNEL_OK")
</pallas_src>

<mosaic_0001>
module attributes {stable_mosaic.version = 11 : i64} {
  func.func @_eca_kernel(%arg0: i32, %arg1: memref<3xf32, #tpu.memory_space<smem>>, %arg2: memref<2x16x256xf32, #tpu.memory_space<vmem>>, %arg3: memref<2x16x256xf32, #tpu.memory_space<vmem>>) attributes {dimension_semantics = [#tpu.dimension_semantics<parallel>], iteration_bounds = array<i64: 2>, scalar_prefetch = 0 : i64, scratch_operands = 0 : i64, tpu.core_type = #tpu.core_type<tc>, window_params = [{transform_indices = @transform_0, window_bounds = array<i64: 3>}, {transform_indices = @transform_1, window_bounds = array<i64: 2, 16, 256>}, {transform_indices = @transform_2, window_bounds = array<i64: 2, 16, 256>}]} {
    %c0 = arith.constant 0 : index
    %c0_0 = arith.constant 0 : index
    %c0_1 = arith.constant 0 : index
    %0 = vector.load %arg2[%c0, %c0_0, %c0_1] : memref<2x16x256xf32, #tpu.memory_space<vmem>>, vector<2x16x256xf32>
    %cst = arith.constant dense<0.000000e+00> : vector<2x16xf32>
    %1 = vector.multi_reduction <add>, %0, %cst [2] : vector<2x16x256xf32> to vector<2x16xf32>
    %cst_2 = arith.constant 5.000000e-03 : f32
    %2 = vector.broadcast %cst_2 : f32 to vector<2x16xf32>
    %3 = arith.mulf %1, %2 : vector<2x16xf32>
    %cst_3 = arith.constant 0.000000e+00 : f32
    %4 = vector.broadcast %cst_3 : f32 to vector<2x1xf32>
    %5 = tpu.concatenate %4, %3, %4 in 1 : vector<2x1xf32>, vector<2x16xf32>, vector<2x1xf32> -> vector<2x18xf32>
    %cst_4 = arith.constant 0.000000e+00 : f32
    %6 = vector.broadcast %cst_4 : f32 to vector<2x16xf32>
    %c0_5 = arith.constant 0 : index
    %7 = memref.load %arg1[%c0_5] : memref<3xf32, #tpu.memory_space<smem>>
    %8 = vector.extract_strided_slice %5 {offsets = [0, 0], sizes = [2, 16], strides = [1, 1]} : vector<2x18xf32> to vector<2x16xf32>
    %9 = vector.broadcast %7 : f32 to vector<2x16xf32>
    %10 = arith.mulf %9, %8 : vector<2x16xf32>
    %11 = arith.addf %6, %10 : vector<2x16xf32>
    %c1 = arith.constant 1 : index
    %12 = memref.load %arg1[%c1] : memref<3xf32, #tpu.memory_space<smem>>
    %13 = vector.extract_strided_slice %5 {offsets = [0, 1], sizes = [2, 16], strides = [1, 1]} : vector<2x18xf32> to vector<2x16xf32>
    %14 = vector.broadcast %12 : f32 to vector<2x16xf32>
    %15 = arith.mulf %14, %13 : vector<2x16xf32>
    %16 = arith.addf %11, %15 : vector<2x16xf32>
    %c2 = arith.constant 2 : index
    %17 = memref.load %arg1[%c2] : memref<3xf32, #tpu.memory_space<smem>>
    %18 = vector.extract_strided_slice %5 {offsets = [0, 2], sizes = [2, 16], strides = [1, 1]} : vector<2x18xf32> to vector<2x16xf32>
    %19 = vector.broadcast %17 : f32 to vector<2x16xf32>
    %20 = arith.mulf %19, %18 : vector<2x16xf32>
    %21 = arith.addf %16, %20 : vector<2x16xf32>
    %cst_6 = arith.constant dense<0xFF800000> : vector<2xf32>
    %22 = vector.multi_reduction <maximumf>, %21, %cst_6 [1] : vector<2x16xf32> to vector<2xf32>
    %23 = vector.shape_cast %22 : vector<2xf32> to vector<2x1xf32>
    %24 = vector.broadcast %23 : vector<2x1xf32> to vector<2x16xf32>
    %25 = arith.subf %21, %24 : vector<2x16xf32>
    %26 = math.exp %25 : vector<2x16xf32>
    %cst_7 = arith.constant dense<0.000000e+00> : vector<2xf32>
    %27 = vector.multi_reduction <add>, %26, %cst_7 [1] : vector<2x16xf32> to vector<2xf32>
    %28 = vector.shape_cast %27 : vector<2xf32> to vector<2x1xf32>
    %29 = vector.broadcast %28 : vector<2x1xf32> to vector<2x16xf32>
    %30 = arith.divf %26, %29 : vector<2x16xf32>
    %c0_8 = arith.constant 0 : index
    %c0_9 = arith.constant 0 : index
    %c0_10 = arith.constant 0 : index
    %31 = vector.load %arg2[%c0_8, %c0_9, %c0_10] : memref<2x16x256xf32, #tpu.memory_space<vmem>>, vector<2x16x256xf32>
    %32 = vector.shape_cast %30 : vector<2x16xf32> to vector<2x16x1xf32>
    %33 = vector.broadcast %32 : vector<2x16x1xf32> to vector<2x16x256xf32>
    %34 = arith.mulf %31, %33 : vector<2x16x256xf32>
    %c0_11 = arith.constant 0 : index
    %c0_12 = arith.constant 0 : index
    %c0_13 = arith.constant 0 : index
    %35 = vector.load %arg3[%c0_11, %c0_12, %c0_13] : memref<2x16x256xf32, #tpu.memory_space<vmem>>, vector<2x16x256xf32>
    tpu.vector_store %arg3[%c0_11, %c0_12, %c0_13], %34 {strides = array<i32>} : memref<2x16x256xf32, #tpu.memory_space<vmem>>, vector<2x16x256xf32>,
    return
  }
  func.func @transform_0(%arg0: i32) -> i32 {
    %c0_i32 = arith.constant 0 : i32
    %c0_i32_0 = arith.constant 0 : i32
    return %c0_i32 : i32
  }
  func.func @transform_1(%arg0: i32) -> (i32, i32, i32) {
    %c0_i32 = arith.constant 0 : i32
    %c0_i32_0 = arith.constant 0 : i32
    %c0_i32_1 = arith.constant 0 : i32
    return %arg0, %c0_i32, %c0_i32_0 : i32, i32, i32
  }
  func.func @transform_2(%arg0: i32) -> (i32, i32, i32) {
    %c0_i32 = arith.constant 0 : i32
    %c0_i32_0 = arith.constant 0 : i32
    %c0_i32_1 = arith.constant 0 : i32
    return %arg0, %c0_i32, %c0_i32_0 : i32, i32, i32
  }
}

</mosaic_0001>

<llo_original>
// kernel: tpu_custom_call.1
$region0: #{tpu_custom_call.1}
  #allocation0 [shape = 'u32[]', space=smem, size = 0x4, offset = 0x4, fixed_abs, tag = 'smem constant byte address 0x4 - core index']
  #allocation1 [shape = 'u32[144,128]{1,0:T(1,128)}', space=vmem, size = 0x12000, scoped, tag = 'internal scratch']
  %s0 = inlined_call_operand.hbm [shape: f32[3], index: 0, kind: input, shape index: {}]
  %s1 = inlined_call_operand.hbm [shape: f32[4,16,256], index: 1, kind: input, shape index: {}]
  %s2 = inlined_call_operand.hbm [shape: f32[4,16,256], index: 2, kind: output, shape index: {}]
  %s3 = sld [smem:[#allocation0]]
  $region49: #{tpu_custom_call.1} parent=0
    _
  %s5 = ssub.s32 1, %s3
  %s6 = scalar_select 0, %s5, %s3
  $region1: #{tpu_custom_call.1} parent=0
    #allocation2 [shape = 'u8[512]{0}', space=smem, size = 0x200, scoped, tag = 'input window, operand 0, single buffered']
    #allocation3 [shape = 's32[2]{0}', space=sflag, size = 0x8, scoped, tag = 'scoped memory for tpu_custom_call.1']
    #allocation4 [shape = 's32[2]{0}', space=sflag, size = 0x8, scoped, tag = 'scoped memory for tpu_custom_call.1']
    #allocation5 [shape = 's32[2]{0}', space=sflag, size = 0x8, scoped, tag = 'scoped memory for tpu_custom_call.1']
    #allocation6 [shape = 'u8[65536]{0}', space=vmem, size = 0x10000, scoped, tag = 'input window, operand 1']
    #allocation7 [shape = 'u8[65536]{0}', space=vmem, size = 0x10000, scoped, tag = 'output window, operand 0']
    %7 = vsyncpa [#allocation5], 0
    %8 = vsyncpa [#allocation3], 0
    %s9 = scalar_lea.sflag [#allocation3], 1
    %10 = vsyncpa %s9, 0
    %11 = vsyncpa [#allocation4], 0
    %s12 = scalar_lea.sflag [#allocation4], 1
    %13 = vsyncpa %s12, 0
    loop: start=0, step=1, limit=4
    $region2: #{tpu_custom_call.1} parent=1 // loop_pre_header
      _
    $region3: #{tpu_custom_call.1} parent=1 // loop_header
      %s15 = sphi 0, %s19
      %p16 = scmp.ge.s32.totalorder %s15, 4
      %s23 = sphi 0, %s23
      %s25 = sphi 0, %s23
      %s26 = sphi 0, %s25
      %s40 = sphi 0, %s26
      %s46 = sphi 0, %s48
      %s49 = sphi 0, %s46
      %s50 = sphi 0, %s49
      %s66 = sphi 0, %s50
      %s72 = sphi 0, %s74
      %s75 = sphi 0, %s72
      %s76 = sphi 0, %s75
      %s92 = sphi 0, %s76
    $region4: #{tpu_custom_call.1} parent=1 // loop_header_branch
      %18 = sbr.rel (%p16) target = $region8
    $region5: #{tpu_custom_call.1} parent=1 // loop_body
      %s20 = ssub.s32 %s15, 1
      %s21 = ssub.s32 %s15, 2
      %s22 = sadd.s32 %s15, 1
      %s24 = sadd.s32 %s23, 1
      %p27 = scmp.eq.s32.totalorder %s15, 1
      %p28 = scmp.ne.s32.totalorder %s23, %s25
      %p29 = scmp.eq.s32.totalorder %s15, 0
      %p30 = por %p28, %p29
      %p31 = scmp.ne.s32.totalorder %s23, %s25
      %p32 = scmp.eq.s32.totalorder %s20, 1
      %p33 = por %p31, %p32
      %p34 = scmp.ne.s32.totalorder %s25, %s26
      %p35 = scmp.eq.s32.totalorder %s20, 0
      %p36 = por %p34, %p35
      %p37 = scmp.ne.s32.totalorder %s25, %s26
      %p38 = scmp.eq.s32.totalorder %s21, 1
      %p39 = por %p37, %p38
      %p41 = scmp.ne.s32.totalorder %s26, %s40
      %p42 = scmp.eq.s32.totalorder %s21, 0
      %p43 = por %p41, %p42
      %s44 = ssub.s32 %s15, %s22
      %p45 = scmp.eq.s32.totalorder %s44, 0
      %s47 = sadd.s32 %s46, 1
      %s48 = scalar_select %p45, %s46, %s47
      %p51 = pneg %p45
      %p52 = scmp.eq.s32.totalorder %s15, 1
      %p53 = por %p51, %p52
      %p54 = scmp.ne.s32.totalorder %s46, %s49
      %p55 = scmp.eq.s32.totalorder %s15, 0
      %p56 = por %p54, %p55
      %p57 = scmp.ne.s32.totalorder %s46, %s49
      %p58 = scmp.eq.s32.totalorder %s20, 1
      %p59 = por %p57, %p58
      %p60 = scmp.ne.s32.totalorder %s49, %s50
      %p61 = scmp.eq.s32.totalorder %s20, 0
      %p62 = por %p60, %p61
      %p63 = scmp.ne.s32.totalorder %s49, %s50
      %p64 = scmp.eq.s32.totalorder %s21, 1
      %p65 = por %p63, %p64
      %p67 = scmp.ne.s32.totalorder %s50, %s66
      %p68 = scmp.eq.s32.totalorder %s21, 0
      %p69 = por %p67, %p68
      %s70 = ssub.s32 %s15, %s22
      %p71 = scmp.eq.s32.totalorder %s70, 0
      %s73 = sadd.s32 %s72, 1
      %s74 = scalar_select %p71, %s72, %s73
      %p77 = pneg %p71
      %p78 = scmp.eq.s32.totalorder %s15, 1
      %p79 = por %p77, %p78
      %p80 = scmp.ne.s32.totalorder %s72, %s75
      %p81 = scmp.eq.s32.totalorder %s15, 0
      %p82 = por %p80, %p81
      %p83 = scmp.ne.s32.totalorder %s72, %s75
      %p84 = scmp.eq.s32.totalorder %s20, 1
      %p85 = por %p83, %p84
      %p86 = scmp.ne.s32.totalorder %s75, %s76
      %p87 = scmp.eq.s32.totalorder %s20, 0
      %p88 = por %p86, %p87
      %p89 = scmp.ne.s32.totalorder %s75, %s76
      %p90 = scmp.eq.s32.totalorder %s21, 1
      %p91 = por %p89, %p90
      %p93 = scmp.ne.s32.totalorder %s76, %s92
      %p94 = scmp.eq.s32.totalorder %s21, 0
      %p95 = por %p93, %p94
      %p96 = scmp.le.s32.totalorder 1, %s15
      %p97 = scmp.lt.s32.totalorder %s15, 3
      %p98 = pnand %p96, %p97
      %p99 = pneg %p98
      // Predicated region
      $region9: #{tpu_custom_call.1} parent=5 // pred_check
        _
      $region10: #{tpu_custom_call.1} parent=5 // pred_check_branch
        %101 = sbr.rel (%p98) target = $region12
      $region11: #{tpu_custom_call.1} parent=5 // pred_region
        %s102 = ssub.s32 %s15, 1
        // Predicated region
        $region13: #{tpu_custom_call.1} parent=11 // pred_check
          %p103 = pneg %p36
        $region14: #{tpu_custom_call.1} parent=11 // pred_check_branch
          %105 = sbr.rel (%p103) target = $region16
        $region15: #{tpu_custom_call.1} parent=11 // pred_region
          %s107 = ssub.s32 16, 16
          %108 = vsyncadd [#allocation5], %s107
          %111 = dma.hbm_to_smem %s0, 16, [#allocation2], [#allocation5]
        $region16: #{tpu_custom_call.1} parent=11 // pred_fallthru
          _
      $region12: #{tpu_custom_call.1} parent=5 // pred_fallthru
        _
      %p112 = scmp.lt.s32.totalorder %s15, 2
      // Predicated region
      $region17: #{tpu_custom_call.1} parent=5 // pred_check
        %p113 = pneg %p112
      $region18: #{tpu_custom_call.1} parent=5 // pred_check_branch
        %115 = sbr.rel (%p113) target = $region20
      $region19: #{tpu_custom_call.1} parent=5 // pred_region
        // Predicated region
        $region21: #{tpu_custom_call.1} parent=19 // pred_check
          %p116 = pneg %p56
        $region22: #{tpu_custom_call.1} parent=19 // pred_check_branch
          %118 = sbr.rel (%p116) target = $region24
        $region23: #{tpu_custom_call.1} parent=19 // pred_region
          %s119 = sand.u32 %s46, 1
          %s120 = scalar_lea.sflag [#allocation3], %s119
          %s121 = sand.u32 %s46, 1
          %s122 = smul.addr %s121, 64
          %s123 = scalar_lea.vmem [#allocation6], %s122
          %s124 = smul.u32 2, %s15
          %s126 = ssub.s32 1024, 1024
          %127 = vsyncadd %s120, %s126
          %s128 = smul.addr %s124, 4
          %s129 = smul.addr %s128, 128
          %s130 = scalar_lea.hbm %s1, %s129
          %s131 = sshll.u32 %s123, 4
          %s132 = int_to_ptr.vmem [resolvable:$true] %s131
          %137 = dma.hbm_to_vmem [thread:$0]  %s130, 1024, %s132, %s120, 256, 256, 16
        $region24: #{tpu_custom_call.1} parent=19 // pred_fallthru
          _
      $region20: #{tpu_custom_call.1} parent=5 // pred_fallthru
        _
      %p138 = scmp.le.s32.totalorder 1, %s15
      %p139 = scmp.lt.s32.totalorder %s15, 3
      %p140 = pnand %p138, %p139
      %p141 = pneg %p140
      // Predicated region
      $region25: #{tpu_custom_call.1} parent=5 // pred_check
        _
      $region26: #{tpu_custom_call.1} parent=5 // pred_check_branch
        %143 = sbr.rel (%p140) target = $region28
      $region27: #{tpu_custom_call.1} parent=5 // pred_region
        %s144 = ssub.s32 %s15, 1
        // Predicated region
        $region29: #{tpu_custom_call.1} parent=27 // pred_check
          %p145 = pneg %p36
        $region30: #{tpu_custom_call.1} parent=27 // pred_check_branch
          %147 = sbr.rel (%p145) target = $region32
        $region31: #{tpu_custom_call.1} parent=27 // pred_region
          %148 = dma.done [#allocation5], 16
        $region32: #{tpu_custom_call.1} parent=27 // pred_fallthru
          _
        %s149 = sand.u32 %s49, 1
        %s150 = scalar_lea.sflag [#allocation3], %s149
        %s151 = sand.u32 %s49, 1
        %s152 = smul.addr %s151, 64
        %s153 = scalar_lea.vmem [#allocation6], %s152
        // Predicated region
        $region33: #{tpu_custom_call.1} parent=27 // pred_check
          %p154 = pneg %p62
        $region34: #{tpu_custom_call.1} parent=27 // pred_check_branch
          %156 = sbr.rel (%p154) target = $region36
        $region35: #{tpu_custom_call.1} parent=27 // pred_region
          %157 = dma.done %s150, 1024
        $region36: #{tpu_custom_call.1} parent=27 // pred_fallthru
          _
        %158 = sfence
        %p159 = pneg %p36
        %p160 = pneg %p33
        %s161 = sand.u32 %s49, 1
        %s162 = scalar_lea.sflag [#allocation3], %s161
        %s163 = sand.u32 %s49, 1
        %s164 = smul.addr %s163, 64
        %s165 = scalar_lea.vmem [#allocation6], %s164
        %p166 = pneg %p62
        %p167 = pneg %p59
        %p168 = pneg %p88
        %p169 = pneg %p85
        %s170 = sand.u32 %s75, 1
        %s171 = scalar_lea.sflag [#allocation4], %s170
        %s172 = sand.u32 %s75, 1
        %s173 = smul.addr %s172, 64
        %s174 = scalar_lea.vmem [#allocation7], %s173
        %s175 = smul.u32 2, %s20
        %s176 = smul.u32 2, %s20
        %v177 = vld [vmem:[%s153] sm:$0xff]
        %v178 = vld [vmem:[%s153 + $0x8] sm:$0xff]
        %v179 = vld [vmem:[%s153 + $0x10] sm:$0xff]
        %v180 = vld [vmem:[%s153 + $0x18] sm:$0xff]
        %v181 = vld [vmem:[%s153 + $0x20] sm:$0xff]
        %v182 = vld [vmem:[%s153 + $0x28] sm:$0xff]
        %v183 = vld [vmem:[%s153 + $0x30] sm:$0xff]
        %v184 = vld [vmem:[%s153 + $0x38] sm:$0xff]
        %v185 = vadd.f32 %v177, %v178
        %186 = vadd.xlane.f32.xlu0 %v185
        %v187 = vpop.xlane.xlu0 %186
        %v188 = vadd.f32 %v179, %v180
        %189 = vadd.xlane.f32.xlu0 %v188
        %v190 = vpop.xlane.xlu0 %189
        %v191 = vadd.f32 %v181, %v182
        %192 = vadd.xlane.f32.xlu0 %v191
        %v193 = vpop.xlane.xlu0 %192
        %v194 = vadd.f32 %v183, %v184
        %195 = vadd.xlane.f32.xlu0 %v194
        %v196 = vpop.xlane.xlu0 %195
        %v197 = vmul.f32 %v187, 0.005
        %v198 = vmul.f32 %v190, 0.005
        %v199 = vmul.f32 %v193, 0.005
        %v200 = vmul.f32 %v196, 0.005
        %v205 = vlaneseq
        %v206 = vand.u32 %v205, 127
        %v207 = vadd.s32 %v206, 4294967295
        %v208 = vlaneseq
        %v209 = vshrl.u32 %v208, 7
        %v210 = vsub.s32 %v207, %v209
        %v211 = vrot.slane %v197, %v210
        %v212 = vadd.s32 %v206, 4294967287
        %v213 = vlaneseq
        %v214 = vshrl.u32 %v213, 7
        %v215 = vsub.s32 %v212, %v214
        %v216 = vrot.slane %v198, %v215
        %vm217 = vcmask 138312
        %v218 = vsel %vm217, %v216, %v211
        %v219 = vlaneseq
        %v220 = vshrl.u32 %v219, 7
        %v221 = vsub.s32 %v207, %v220
        %v222 = vrot.slane %v199, %v221
        %v223 = vlaneseq
        %v224 = vshrl.u32 %v223, 7
        %v225 = vsub.s32 %v212, %v224
        %v226 = vrot.slane %v200, %v225
        %v227 = vsel %vm217, %v226, %v222
        %vm228 = vcmask 1041409
        %v229 = vsel %vm228, %v227, %v218
        %vm231 = vcmask 7168
        %v232 = vsel %vm231, 0.0, %v229
        %vm233 = vcmask 138240
        %v234 = vsel %vm233, %v232, 0.0
        %s235 = sld [smem:[#allocation2]]
        %v236 = vstv %s235
        %v237 = vmul.f32 %v236, %v234
        %v238 = vadd.f32 %v237, 0.0
        %s239 = sld [smem:[#allocation2 + $0x1]]
        %v240 = vstv %s239
        %v241 = vmul.f32 %v240, %v234
        %243 = vrot.lane.b32.xlu0 %v241, 127
        %v244 = vpop.permute.xlu0 %243
        %v246 = vadd.f32 %v238, %v244
        %s247 = sld [smem:[#allocation2 + $0x2]]
        %v248 = vstv %s247
        %v249 = vmul.f32 %v248, %v234
        %251 = vrot.lane.b32.xlu0 %v249, 126
        %v252 = vpop.permute.xlu0 %251
        %v254 = vadd.f32 %v246, %v252
        %vm255 = vcmask 123904
        %v256 = vsel %vm255, %v254, -inf
        %257 = vmax.xlane.f32.xlu0 %v256
        %v258 = vpop.xlane.xlu0 %257
        %v259 = vsub.f32 %v254, %v258
        %v260 = vmul.f32 %v259, 1.442695
        %v261 = vpow.pop %v260
        %v262 = vsel %vm255, %v261, 0.0
        %263 = vadd.xlane.f32.xlu0 %v262
        %v264 = vpop.xlane.xlu0 %263
        %v265 = vrcp.pop %v264
        %v266 = vmul.f32 %v261, %v265
        %v267 = vlaneseq
        %v268 = vshrl.u32 %v267, 7
        %v269 = vsub.s32 0, %v268
        %v270 = vrot.slane %v266, %v269
        %272 = vbcast.lane.b32.xlu0 %v270, 256
        %v273 = vpop.permute.xlu0 %272
        %s275 = sor.u32 256, 8
        %276 = vbcast.lane.b32.xlu0 %v270, %s275
        %v277 = vpop.permute.xlu0 %276
        %v278 = vlaneseq
        %v279 = vshrl.u32 %v278, 7
        %v280 = vsub.s32 1, %v279
        %v281 = vrot.slane %v266, %v280
        %283 = vbcast.lane.b32.xlu0 %v281, 256
        %v284 = vpop.permute.xlu0 %283
        %s286 = sor.u32 256, 8
        %287 = vbcast.lane.b32.xlu0 %v281, %s286
        %v288 = vpop.permute.xlu0 %287
        %v289 = vmul.f32 %v177, %v273
        %v290 = vmul.f32 %v178, %v273
        %v291 = vmul.f32 %v179, %v277
        %v292 = vmul.f32 %v180, %v277
        %v293 = vmul.f32 %v181, %v284
        %v294 = vmul.f32 %v182, %v284
        %v295 = vmul.f32 %v183, %v288
        %v296 = vmul.f32 %v184, %v288
        %297 = vst [vmem:[%s174] sm:$0xff] %v289
        %298 = vst [vmem:[%s174 + $0x8] sm:$0xff] %v290
        %299 = vst [vmem:[%s174 + $0x10] sm:$0xff] %v291
        %300 = vst [vmem:[%s174 + $0x18] sm:$0xff] %v292
        %301 = vst [vmem:[%s174 + $0x20] sm:$0xff] %v293
        %302 = vst [vmem:[%s174 + $0x28] sm:$0xff] %v294
        %303 = vst [vmem:[%s174 + $0x30] sm:$0xff] %v295
        %304 = vst [vmem:[%s174 + $0x38] sm:$0xff] %v296
        %s305 = sand.u32 %s75, 1
        %s306 = scalar_lea.sflag [#allocation4], %s305
        %s307 = sand.u32 %s75, 1
        %s308 = smul.addr %s307, 64
        %s309 = scalar_lea.vmem [#allocation7], %s308
        // Predicated region
        $region37: #{tpu_custom_call.1} parent=27 // pred_check
          %p310 = pneg %p85
        $region38: #{tpu_custom_call.1} parent=27 // pred_check_branch
          %312 = sbr.rel (%p310) target = $region40
        $region39: #{tpu_custom_call.1} parent=27 // pred_region
          %s313 = smul.u32 2, %s20
          %s315 = ssub.s32 1024, 1024
          %316 = vsyncadd %s306, %s315
          %s317 = smul.addr %s313, 4
          %s318 = smul.addr %s317, 128
          %s319 = scalar_lea.hbm %s2, %s318
          %s320 = sshll.u32 %s309, 4
          %s321 = int_to_ptr.vmem [resolvable:$true] %s320
          %326 = dma.vmem_to_hbm [thread:$0]  %s321, 1024, %s319, %s306, 256, 256, 16
        $region40: #{tpu_custom_call.1} parent=27 // pred_fallthru
          _
      $region28: #{tpu_custom_call.1} parent=5 // pred_fallthru
        _
      %p327 = scmp.le.s32.totalorder 2, %s15
      // Predicated region
      $region41: #{tpu_custom_call.1} parent=5 // pred_check
        %p328 = pneg %p327
      $region42: #{tpu_custom_call.1} parent=5 // pred_check_branch
        %330 = sbr.rel (%p328) target = $region44
      $region43: #{tpu_custom_call.1} parent=5 // pred_region
        %s331 = ssub.s32 %s15, 2
        // Predicated region
        $region45: #{tpu_custom_call.1} parent=43 // pred_check
          %p332 = pneg %p91
        $region46: #{tpu_custom_call.1} parent=43 // pred_check_branch
          %334 = sbr.rel (%p332) target = $region48
        $region47: #{tpu_custom_call.1} parent=43 // pred_region
          %s335 = sand.u32 %s76, 1
          %s336 = scalar_lea.sflag [#allocation4], %s335
          %s337 = sand.u32 %s76, 1
          %s338 = smul.addr %s337, 64
          %s339 = scalar_lea.vmem [#allocation7], %s338
          %340 = dma.done %s336, 1024
        $region48: #{tpu_custom_call.1} parent=43 // pred_fallthru
          _
      $region44: #{tpu_custom_call.1} parent=5 // pred_fallthru
        _
    $region6: #{tpu_custom_call.1} parent=1 // loop_footer
      %s19 = sadd.s32 1, %s15
    $region7: #{tpu_custom_call.1} parent=1 // loop_footer_branch
      %14 = sbr.rel target = $region3
    $region8: #{tpu_custom_call.1} parent=1 // loop_exit
      _
    %341 = vsyncpa [#allocation3], 1
    %s342 = scalar_lea.sflag [#allocation3], 1
    %343 = vsyncpa %s342, 1
    %344 = vsyncpa [#allocation4], 1
    %s345 = scalar_lea.sflag [#allocation4], 1
    %346 = vsyncpa %s345, 1
    %347 = vsyncpa [#allocation5], 1
    %s348 = scalar_lea.sflag [#allocation5], 1
    %349 = vsyncpa %s348, 1

</llo_original>
